<compile_context>
chip_gen: v7x
topology: tpu7x:2x2x1
jax: 0.10.0
libtpu: 0.0.40
codegen_flags: <defaults>
</compile_context>

<pallas_src>
import math

import jax
import jax.numpy as jnp
from jax import lax
from jax.experimental import pallas as pl
from jax.experimental.pallas import tpu as pltpu

LANE = 128


def _round_up(x, m):
    return (x + m - 1) // m * m


def _pad_2d(a, rows, cols):
    pr, pc = rows - a.shape[0], cols - a.shape[1]
    if pr == 0 and pc == 0:
        return a
    return jnp.pad(a, ((0, pr), (0, pc)))


def _default_vmem_limit():
    # Generous scoped-VMEM cap where the chip allows it (v5e/v6e: 128 MiB
    # physical), automatically tighter on chips with less (v7x: 64 MiB / TC).
    try:
        cap = int(pltpu.get_tpu_info().vmem_capacity_bytes)
        return min(cap * 3 // 4, 96 * 1024 * 1024)
    except Exception:
        return 32 * 1024 * 1024


_VMEM_LIMIT = _default_vmem_limit()


# ---------------------------------------------------------------------------
# 1x1 conv (pointwise matmul) + folded BN (+ residual) (+ ReLU)
# ---------------------------------------------------------------------------
def _make_matmul_bn_kernel(apply_relu, with_residual):
    def body(x_ref, w_ref, s_ref, b_ref, r_ref, o_ref):
        # Full-K bf16 MXU matmul with f32 accumulation, fused BN epilogue.
        y = jnp.dot(x_ref[...], w_ref[...], preferred_element_type=jnp.float32)
        y = y * s_ref[...] + b_ref[...]
        if r_ref is not None:
            y = y + r_ref[...].astype(jnp.float32)
        if apply_relu:
            y = jnp.maximum(y, 0.0)
        o_ref[...] = y.astype(o_ref.dtype)

    if with_residual:
        def kernel(x_ref, w_ref, s_ref, b_ref, r_ref, o_ref):
            body(x_ref, w_ref, s_ref, b_ref, r_ref, o_ref)
    else:
        def kernel(x_ref, w_ref, s_ref, b_ref, o_ref):
            body(x_ref, w_ref, s_ref, b_ref, None, o_ref)
    return kernel


def pointwise_conv_bn(x2d, w, scale, bias, *, relu, residual=None,
                      out_dtype=jnp.bfloat16, tm_max=256):
    """y = act((x2d @ w) * scale + bias [+ residual]).

    x2d:      (M, Kp) bf16/f32 rows = flattened pixels; Kp multiple of 128 with
              real input channels K = w.shape[0] zero-padded up to Kp.
    w:        (K, Nc) f32 1x1-conv weight (in, out).
    residual: optional (M, Np) with Np = round_up(Nc, 128), padded chans zero.
    Returns (M, Np) in `out_dtype` with channels beyond Nc equal to zero.
    """
    M, Kp = x2d.shape
    K, Nc = w.shape
    Np = _round_up(Nc, LANE)

    tn = 256 if Np % 256 == 0 else LANE          # MXU-friendly, lane-dense
    tm = min(tm_max, _round_up(M, 8))
    Mp = _round_up(M, tm)

    x_p = x2d.astype(jnp.bfloat16)
    if Mp != M:
        x_p = jnp.pad(x_p, ((0, Mp - M), (0, 0)))
    w_p = _pad_2d(w, Kp, Np).astype(jnp.bfloat16)
    s_p = _pad_2d(scale.astype(jnp.float32).reshape(1, -1), 1, Np)
    b_p = _pad_2d(bias.astype(jnp.float32).reshape(1, -1), 1, Np)

    operands = [x_p, w_p, s_p, b_p]
    in_specs = [
        pl.BlockSpec((tm, Kp), lambda i, j: (i, 0)),   # full-K panel per step
        pl.BlockSpec((Kp, tn), lambda i, j: (0, j)),
        pl.BlockSpec((1, tn), lambda i, j: (0, j)),
        pl.BlockSpec((1, tn), lambda i, j: (0, j)),
    ]
    if residual is not None:
        r_p = residual
        if Mp != M:
            r_p = jnp.pad(r_p, ((0, Mp - M), (0, 0)))
        operands.append(r_p)
        in_specs.append(pl.BlockSpec((tm, tn), lambda i, j: (i, j)))

    kernel = _make_matmul_bn_kernel(relu, residual is not None)

    flops = 2 * Mp * Kp * Np
    bytes_accessed = int(2 * (Mp * Kp + Kp * Np + Mp * Np
                              + (Mp * Np if residual is not None else 0))
                         + 8 * Np)

    out = pl.pallas_call(
        kernel,
        out_shape=jax.ShapeDtypeStruct((Mp, Np), out_dtype),
        grid=(Mp // tm, Np // tn),
        in_specs=in_specs,
        out_specs=pl.BlockSpec((tm, tn), lambda i, j: (i, j)),
        compiler_params=pltpu.CompilerParams(
            dimension_semantics=("parallel", "parallel"),
            vmem_limit_bytes=_VMEM_LIMIT,
        ),
        cost_estimate=pl.CostEstimate(
            flops=flops, transcendentals=0, bytes_accessed=bytes_accessed),
    )(*operands)
    return out if Mp == M else out[:M]


# ---------------------------------------------------------------------------
# 3x3 conv (pad 1, arbitrary stride) + folded BN + ReLU
# ---------------------------------------------------------------------------
def _make_conv3x3_kernel(taps, Ho, Wo):
    # taps: static list of (tap_index, row_base, col_base).
    def kernel(x_ref, w_ref, s_ref, b_ref, o_ref, acc_ref):
        cin = x_ref.shape[-1]
        cout = o_ref.shape[-1]
        for i, (t, rb, cb) in enumerate(taps):       # unrolled: 9 MXU matmuls
            patch = x_ref[0, rb:rb + Ho, cb:cb + Wo, :].reshape(Ho * Wo, cin)
            contrib = jnp.dot(patch, w_ref[t],
                              preferred_element_type=jnp.float32)
            if i == 0:
                acc_ref[...] = contrib               # first tap: no zero-init
            else:
                acc_ref[...] += contrib
        y = jnp.maximum(acc_ref[...] * s_ref[...] + b_ref[...], 0.0)
        o_ref[...] = y.reshape(1, Ho, Wo, cout).astype(o_ref.dtype)
    return kernel


def conv3x3_bn_relu(x_nhwc, w, scale, bias, *, stride=1):
    """3x3 / pad-1 conv (any stride) + folded BN + ReLU on channel-padded NHWC.

    x_nhwc: (N, H, W, Cin_p) bf16; real input channels = w.shape[2], rest zero.
    w:      (3, 3, Cin, Cout) f32.
    Returns (N, Ho, Wo, Cout_p) bf16 with channels beyond Cout equal to zero.
    """
    N, H, W, Cin_p = x_nhwc.shape
    Cin, Cout = w.shape[2], w.shape[3]
    Cout_p = _round_up(Cout, LANE)
    Ho = (H - 1) // stride + 1
    Wo = (W - 1) // stride + 1

    xp = jnp.pad(x_nhwc, ((0, 0), (1, 1), (1, 1), (0, 0)))   # spatial pad 1

    if stride == 1:
        Hh, Wh = H + 2, W + 2
        x_stack = xp
        taps = [(t, t // 3, t % 3) for t in range(9)]
    else:
        # Space-to-depth phase decomposition: tap (ky,kx) reads phase
        # (ky%s, kx%s) at offset (ky//s, kx//s) -> 9 dense, unstrided matmuls
        # at exactly the strided-output FLOP count.
        n_ph = min(stride, 3)
        Hh = Ho + 2 // stride
        Wh = Wo + 2 // stride
        phases = []
        for p in range(n_ph):
            for q in range(n_ph):
                ph = xp[:, p::stride, q::stride, :][:, :Hh, :Wh, :]
                ph = jnp.pad(ph, ((0, 0), (0, Hh - ph.shape[1]),
                                  (0, Wh - ph.shape[2]), (0, 0)))
                phases.append(ph)
        x_stack = jnp.concatenate(phases, axis=1)    # (N, n_ph*n_ph*Hh, Wh, C)
        taps = []
        for t in range(9):
            ky, kx = divmod(t, 3)
            pidx = (ky % stride) * n_ph + (kx % stride)
            taps.append((t, pidx * Hh + ky // stride, kx // stride))

    # Sublane-align the W axis so per-tap (Ho,Wo,C)->(Ho*Wo,C) reshapes stay cheap.
    Wh_al = _round_up(x_stack.shape[2], 8)
    if Wh_al != x_stack.shape[2]:
        x_stack = jnp.pad(
            x_stack, ((0, 0), (0, 0), (0, Wh_al - x_stack.shape[2]), (0, 0)))
    x_stack = x_stack.astype(jnp.bfloat16)
    Hrows = x_stack.shape[1]

    w_p = jnp.pad(w, ((0, 0), (0, 0), (0, Cin_p - Cin), (0, Cout_p - Cout)))
    w_p = w_p.reshape(9, Cin_p, Cout_p).astype(jnp.bfloat16)
    s_p = _pad_2d(scale.astype(jnp.float32).reshape(1, -1), 1, Cout_p)
    b_p = _pad_2d(bias.astype(jnp.float32).reshape(1, -1), 1, Cout_p)

    tco = 256 if Cout_p % 256 == 0 else LANE
    n_co = Cout_p // tco

    kernel = _make_conv3x3_kernel(taps, Ho, Wo)

    flops = 2 * 9 * N * Ho * Wo * Cin_p * Cout_p
    bytes_accessed = int(2 * (x_stack.size + w_p.size + N * Ho * Wo * Cout_p)
                         + 8 * Cout_p)

    out = pl.pallas_call(
        kernel,
        out_shape=jax.ShapeDtypeStruct((N, Ho, Wo, Cout_p), jnp.bfloat16),
        grid=(N, n_co),
        in_specs=[
            pl.BlockSpec((1, Hrows, Wh_al, Cin_p), lambda n, j: (n, 0, 0, 0)),
            pl.BlockSpec((9, Cin_p, tco), lambda n, j: (0, 0, j)),
            pl.BlockSpec((1, tco), lambda n, j: (0, j)),
            pl.BlockSpec((1, tco), lambda n, j: (0, j)),
        ],
        out_specs=pl.BlockSpec((1, Ho, Wo, tco), lambda n, j: (n, 0, 0, j)),
        scratch_shapes=[pltpu.VMEM((Ho * Wo, tco), jnp.float32)],
        compiler_params=pltpu.CompilerParams(
            dimension_semantics=("parallel", "parallel"),
            vmem_limit_bytes=_VMEM_LIMIT,
        ),
        cost_estimate=pl.CostEstimate(
            flops=flops, transcendentals=0, bytes_accessed=bytes_accessed),
    )(x_stack, w_p, s_p, b_p)
    return out


# ---------------------------------------------------------------------------
# Full Bottleneck forward
# ---------------------------------------------------------------------------
def bottleneck_forward(x_nchw, params, stride=1):
    """Equivalent of Bottleneck.forward (BN in inference mode, folded)."""
    N, C_in, H, W = x_nchw.shape
    planes = params["w1"].shape[1]
    out_planes = 4 * planes

    Cin_p = _round_up(C_in, LANE)
    planes_p = _round_up(planes, LANE)
    outp_p = _round_up(out_planes, LANE)

    # NHWC, channel-pad once, bf16 once; stays padded until the very end.
    x = jnp.transpose(x_nchw, (0, 2, 3, 1))
    x_p = jnp.pad(x, ((0, 0), (0, 0), (0, 0), (0, Cin_p - C_in)))
    x_p = x_p.astype(jnp.bfloat16)

    M = N * H * W

    # conv1 (1x1) + bn1 + relu
    h1 = pointwise_conv_bn(x_p.reshape(M, Cin_p), params["w1"],
                           params["s1"], params["b1"],
                           relu=True, out_dtype=jnp.bfloat16)
    h1 = h1.reshape(N, H, W, planes_p)

    # conv2 (3x3, stride, pad=1) + bn2 + relu — stride handled in-kernel
    h2 = conv3x3_bn_relu(h1, params["w2"], params["s2"], params["b2"],
                         stride=stride)
    Ho, Wo = h2.shape[1], h2.shape[2]
    Mo = N * Ho * Wo

    # shortcut
    if stride != 1 or C_in != out_planes:
        xs = x_p[:, ::stride, ::stride, :] if stride != 1 else x_p
        sc = pointwise_conv_bn(xs.reshape(Mo, Cin_p), params["wsc"],
                               params["ssc"], params["bsc"],
                               relu=False, out_dtype=jnp.bfloat16)
    else:
        sc = x_p.reshape(Mo, outp_p)     # identity: Cin_p == outp_p by module

    # conv3 (1x1) + bn3, fused residual add + final relu
    out = pointwise_conv_bn(h2.reshape(Mo, planes_p), params["w3"],
                            params["s3"], params["b3"],
                            relu=True, residual=sc, out_dtype=jnp.float32)
    out = out.reshape(N, Ho, Wo, outp_p)[..., :out_planes]
    return jnp.transpose(out, (0, 3, 1, 2))            # back to NCHW


# ---------------------------------------------------------------------------
# Parameter init (torch-like kaiming-uniform conv weights, folded BN)
# ---------------------------------------------------------------------------
def _bn_folded(key, c, eps=1e-5):
    k1, k2, k3, k4 = jax.random.split(key, 4)
    gamma = jax.random.uniform(k1, (c,), jnp.float32, 0.5, 1.5)
    beta = 0.1 * jax.random.normal(k2, (c,), jnp.float32)
    mean = 0.1 * jax.random.normal(k3, (c,), jnp.float32)
    var = jax.random.uniform(k4, (c,), jnp.float32, 0.5, 1.5)
    scale = gamma / jnp.sqrt(var + eps)
    bias = beta - mean * scale
    return scale, bias


def init_bottleneck_params(key, in_planes, planes, stride=1):
    out_planes = 4 * planes
    ks = jax.random.split(key, 8)

    def conv_w(k, fan_in, shape):
        bound = 1.0 / math.sqrt(fan_in)
        return jax.random.uniform(k, shape, jnp.float32, -bound, bound)

    p = {}
    p["w1"] = conv_w(ks[0], in_planes, (in_planes, planes))
    p["s1"], p["b1"] = _bn_folded(ks[1], planes)
    p["w2"] = conv_w(ks[2], planes * 9, (3, 3, planes, planes))
    p["s2"], p["b2"] = _bn_folded(ks[3], planes)
    p["w3"] = conv_w(ks[4], planes, (planes, out_planes))
    p["s3"], p["b3"] = _bn_folded(ks[5], out_planes)
    if stride != 1 or in_planes != out_planes:
        p["wsc"] = conv_w(ks[6], in_planes, (in_planes, out_planes))
        p["ssc"], p["bsc"] = _bn_folded(ks[7], out_planes)
    return p


# ---------------------------------------------------------------------------
# Pure-JAX reference (correctness checking only; f32 HIGHEST precision)
# ---------------------------------------------------------------------------
def bottleneck_ref(x_nchw, params, stride=1):
    hi = lax.Precision.HIGHEST
    x = jnp.transpose(x_nchw, (0, 2, 3, 1))
    out = jnp.einsum("nhwc,cd->nhwd", x, params["w1"], precision=hi)
    out = jnp.maximum(out * params["s1"] + params["b1"], 0.0)
    out = lax.conv_general_dilated(
        out, params["w2"], window_strides=(stride, stride),
        padding=((1, 1), (1, 1)),
        dimension_numbers=("NHWC", "HWIO", "NHWC"), precision=hi)
    out = jnp.maximum(out * params["s2"] + params["b2"], 0.0)
    out = jnp.einsum("nhwc,cd->nhwd", out, params["w3"], precision=hi)
    out = out * params["s3"] + params["b3"]
    in_planes, out_planes = x.shape[-1], params["w3"].shape[1]
    if stride != 1 or in_planes != out_planes:
        xs = x[:, ::stride, ::stride, :]
        sc = jnp.einsum("nhwc,cd->nhwd", xs, params["wsc"], precision=hi)
        sc = sc * params["ssc"] + params["bsc"]
    else:
        sc = x
    out = jnp.maximum(out + sc, 0.0)
    return jnp.transpose(out, (0, 3, 1, 2))


if __name__ == "__main__":
    key = jax.random.PRNGKey(0)
    kx, kxi, kp1, kp2, kp3 = jax.random.split(key, 5)

    # Tolerance is relaxed vs f32-HIGHEST reference because the kernels use
    # bf16 MXU operands and bf16 inter-layer activations (f32 accumulation).
    ATOL = RTOL = 5e-2

    # Projection-shortcut cases (stride 1 and stride 2).
    N, in_planes, planes, H, W = 2, 16, 8, 16, 16
    x = jax.random.normal(kx, (N, in_planes, H, W), jnp.float32)
    for stride, kp in ((1, kp1), (2, kp2)):
        params = init_bottleneck_params(kp, in_planes, planes, stride)
        y = bottleneck_forward(x, params, stride=stride)
        jax.block_until_ready(y)
        y_ref = bottleneck_ref(x, params, stride=stride)
        assert y.shape == y_ref.shape, (y.shape, y_ref.shape)
        assert jnp.allclose(y, y_ref, atol=ATOL, rtol=RTOL), (
            f"mismatch at stride={stride}: "
            f"max abs err {float(jnp.max(jnp.abs(y - y_ref)))}")

    # Identity-shortcut case (in_planes == 4*planes, stride 1).
    x_id = jax.random.normal(kxi, (2, 32, 16, 16), jnp.float32)
    params_id = init_bottleneck_params(kp3, 32, 8, 1)
    y = bottleneck_forward(x_id, params_id, stride=1)
    jax.block_until_ready(y)
    y_ref = bottleneck_ref(x_id, params_id, stride=1)
    assert y.shape == y_ref.shape, (y.shape, y_ref.shape)
    assert jnp.allclose(y, y_ref, atol=ATOL, rtol=RTOL), (
        f"identity-shortcut mismatch: "
        f"max abs err {float(jnp.max(jnp.abs(y - y_ref)))}")

    print("KERNEL_OK")
</pallas_src>

<mosaic_0001>
module attributes {stable_mosaic.version = 11 : i64} {
  func.func @kernel(%arg0: i32, %arg1: i32, %arg2: memref<256x128xbf16, #tpu.memory_space<vmem>>, %arg3: memref<128x128xbf16, #tpu.memory_space<vmem>>, %arg4: memref<1x128xf32, #tpu.memory_space<vmem>>, %arg5: memref<1x128xf32, #tpu.memory_space<vmem>>, %arg6: memref<256x128xbf16, #tpu.memory_space<vmem>>) attributes {dimension_semantics = [#tpu.dimension_semantics<parallel>, #tpu.dimension_semantics<parallel>], iteration_bounds = array<i64: 2, 1>, scalar_prefetch = 0 : i64, scratch_operands = 0 : i64, tpu.core_type = #tpu.core_type<tc>, window_params = [{transform_indices = @transform_0, window_bounds = array<i64: 256, 128>}, {transform_indices = @transform_1, window_bounds = array<i64: 128, 128>}, {transform_indices = @transform_2, window_bounds = array<i64: 1, 128>}, {transform_indices = @transform_3, window_bounds = array<i64: 1, 128>}, {transform_indices = @transform_4, window_bounds = array<i64: 256, 128>}]} {
    %c0 = arith.constant 0 : index
    %c0_0 = arith.constant 0 : index
    %0 = vector.load %arg2[%c0, %c0_0] : memref<256x128xbf16, #tpu.memory_space<vmem>>, vector<256x128xbf16>
    %c0_1 = arith.constant 0 : index
    %c0_2 = arith.constant 0 : index
    %1 = vector.load %arg3[%c0_1, %c0_2] : memref<128x128xbf16, #tpu.memory_space<vmem>>, vector<128x128xbf16>
    %cst = arith.constant dense<0.000000e+00> : vector<256x128xf32>
    %2 = tpu.matmul %0, %1, %cst {dimension_numbers = #tpu.dot_dimension_numbers<[1], [0], [0], [1], [0, 0, 1, 1], [], []>} : vector<256x128xbf16>, vector<128x128xbf16>, vector<256x128xf32> -> vector<256x128xf32>
    %c0_3 = arith.constant 0 : index
    %c0_4 = arith.constant 0 : index
    %3 = vector.load %arg4[%c0_3, %c0_4] : memref<1x128xf32, #tpu.memory_space<vmem>>, vector<1x128xf32>
    %4 = vector.broadcast %3 : vector<1x128xf32> to vector<256x128xf32>
    %5 = arith.mulf %2, %4 : vector<256x128xf32>
    %c0_5 = arith.constant 0 : index
    %c0_6 = arith.constant 0 : index
    %6 = vector.load %arg5[%c0_5, %c0_6] : memref<1x128xf32, #tpu.memory_space<vmem>>, vector<1x128xf32>
    %7 = vector.broadcast %6 : vector<1x128xf32> to vector<256x128xf32>
    %8 = arith.addf %5, %7 : vector<256x128xf32>
    %cst_7 = arith.constant 0.000000e+00 : f32
    %9 = vector.broadcast %cst_7 : f32 to vector<256x128xf32>
    %10 = arith.maximumf %8, %9 : vector<256x128xf32>
    %11 = arith.truncf %10 : vector<256x128xf32> to vector<256x128xbf16>
    %c0_8 = arith.constant 0 : index
    %c0_9 = arith.constant 0 : index
    %12 = vector.load %arg6[%c0_8, %c0_9] : memref<256x128xbf16, #tpu.memory_space<vmem>>, vector<256x128xbf16>
    tpu.vector_store %arg6[%c0_8, %c0_9], %11 {strides = array<i32>} : memref<256x128xbf16, #tpu.memory_space<vmem>>, vector<256x128xbf16>,
    return
  }
  func.func @transform_0(%arg0: i32, %arg1: i32) -> (i32, i32) {
    %c0_i32 = arith.constant 0 : i32
    %c0_i32_0 = arith.constant 0 : i32
    return %arg0, %c0_i32 : i32, i32
  }
  func.func @transform_1(%arg0: i32, %arg1: i32) -> (i32, i32) {
    %c0_i32 = arith.constant 0 : i32
    %c0_i32_0 = arith.constant 0 : i32
    return %c0_i32, %arg1 : i32, i32
  }
  func.func @transform_2(%arg0: i32, %arg1: i32) -> (i32, i32) {
    %c0_i32 = arith.constant 0 : i32
    %c0_i32_0 = arith.constant 0 : i32
    return %c0_i32, %arg1 : i32, i32
  }
  func.func @transform_3(%arg0: i32, %arg1: i32) -> (i32, i32) {
    %c0_i32 = arith.constant 0 : i32
    %c0_i32_0 = arith.constant 0 : i32
    return %c0_i32, %arg1 : i32, i32
  }
  func.func @transform_4(%arg0: i32, %arg1: i32) -> (i32, i32) {
    %c0_i32 = arith.constant 0 : i32
    return %arg0, %arg1 : i32, i32
  }
}

</mosaic_0001>

<llo_original>
// kernel: tpu_custom_call.1
$region0: #{tpu_custom_call.1}
  #allocation0 [shape = 'u32[]', space=smem, size = 0x4, offset = 0x4, fixed_abs, tag = 'smem constant byte address 0x4 - core index']
  #allocation1 [shape = 'u32[144,128]{1,0:T(1,128)}', space=vmem, size = 0x12000, scoped, tag = 'internal scratch']
  %s0 = inlined_call_operand.hbm [shape: bf16[512,128], index: 0, kind: input, shape index: {}]
  %s1 = inlined_call_operand.hbm [shape: bf16[128,128], index: 1, kind: input, shape index: {}]
  %s2 = inlined_call_operand.vmem [shape: f32[1,128], index: 2, kind: input, shape index: {}]
  %s3 = inlined_call_operand.vmem [shape: f32[1,128], index: 3, kind: input, shape index: {}]
  %s4 = inlined_call_operand.hbm [shape: bf16[512,128], index: 4, kind: output, shape index: {}]
  %s5 = sld [smem:[#allocation0]]
  $region57: #{tpu_custom_call.1} parent=0
    _
  %s7 = ssub.s32 1, %s5
  %s8 = scalar_select 0, %s7, %s5
  $region1: #{tpu_custom_call.1} parent=0
    #allocation2 [shape = 'u8[131072]{0}', space=vmem, size = 0x20000, scoped, tag = 'input window, operand 0']
    #allocation3 [shape = 's32[2]{0}', space=sflag, size = 0x8, scoped, tag = 'scoped memory for tpu_custom_call.1']
    #allocation4 [shape = 's32[2]{0}', space=sflag, size = 0x8, scoped, tag = 'scoped memory for tpu_custom_call.1']
    #allocation5 [shape = 'u8[32768]{0}', space=vmem, size = 0x8000, scoped, tag = 'input window, operand 1, single buffered']
    #allocation6 [shape = 's32[1]{0}', space=sflag, size = 0x4, scoped, tag = 'scoped memory for tpu_custom_call.1']
    #allocation7 [shape = 'u8[131072]{0}', space=vmem, size = 0x20000, scoped, tag = 'output window, operand 0']
    %9 = vsyncpa [#allocation3], 0
    %s10 = scalar_lea.sflag [#allocation3], 1
    %11 = vsyncpa %s10, 0
    %12 = vsyncpa [#allocation6], 0
    %13 = vsyncpa [#allocation4], 0
    %s14 = scalar_lea.sflag [#allocation4], 1
    %15 = vsyncpa %s14, 0
    loop: start=0, step=1, limit=4
    $region2: #{tpu_custom_call.1} parent=1 // loop_pre_header
      _
    $region3: #{tpu_custom_call.1} parent=1 // loop_header
      %s17 = sphi 0, %s21
      %p18 = scmp.ge.s32.totalorder %s17, 4
      %s24 = sphi 0, %s36
      %s25 = sphi 0, %s32
      %s26 = sphi 0, %s24
      %s27 = sphi 0, %s25
      %s28 = sphi 0, %s26
      %s29 = sphi 0, %s27
      %s39 = sphi 0, %s41
      %s42 = sphi 0, %s39
      %s43 = sphi 0, %s42
      %s59 = sphi 0, %s43
      %s65 = sphi 0, %s67
      %s68 = sphi 0, %s65
      %s69 = sphi 0, %s68
      %s85 = sphi 0, %s69
      %s91 = sphi 0, %s93
      %s94 = sphi 0, %s91
      %s95 = sphi 0, %s94
      %s111 = sphi 0, %s95
      %s117 = sphi 0, %s119
      %s120 = sphi 0, %s117
      %s121 = sphi 0, %s120
      %s137 = sphi 0, %s121
      %s145 = sphi 0, %s147
      %s148 = sphi 0, %s145
      %s149 = sphi 0, %s148
      %s165 = sphi 0, %s149
    $region4: #{tpu_custom_call.1} parent=1 // loop_header_branch
      %20 = sbr.rel (%p18) target = $region8
    $region5: #{tpu_custom_call.1} parent=1 // loop_body
      %s22 = ssub.s32 %s17, 1
      %s23 = ssub.s32 %s17, 2
      %s30 = sadd.s32 1, %s25
      %p31 = scmp.ge.s32.totalorder %s30, 1
      %s32 = scalar_select %p31, 0, %s30
      %s33 = sadd.s32 1, %s24
      %s34 = scalar_select %p31, %s33, %s24
      %p35 = scmp.ge.s32.totalorder %s34, 2
      %s36 = scalar_select %p35, 0, %s34
      %s37 = ssub.s32 %s24, %s36
      %p38 = scmp.eq.s32.totalorder %s37, 0
      %s40 = sadd.s32 %s39, 1
      %s41 = scalar_select %p38, %s39, %s40
      %p44 = pneg %p38
      %p45 = scmp.eq.s32.totalorder %s17, 1
      %p46 = por %p44, %p45
      %p47 = scmp.ne.s32.totalorder %s39, %s42
      %p48 = scmp.eq.s32.totalorder %s17, 0
      %p49 = por %p47, %p48
      %p50 = scmp.ne.s32.totalorder %s39, %s42
      %p51 = scmp.eq.s32.totalorder %s22, 1
      %p52 = por %p50, %p51
      %p53 = scmp.ne.s32.totalorder %s42, %s43
      %p54 = scmp.eq.s32.totalorder %s22, 0
      %p55 = por %p53, %p54
      %p56 = scmp.ne.s32.totalorder %s42, %s43
      %p57 = scmp.eq.s32.totalorder %s23, 1
      %p58 = por %p56, %p57
      %p60 = scmp.ne.s32.totalorder %s43, %s59
      %p61 = scmp.eq.s32.totalorder %s23, 0
      %p62 = por %p60, %p61
      %s63 = ssub.s32 %s25, %s32
      %p64 = scmp.eq.s32.totalorder %s63, 0
      %s66 = sadd.s32 %s65, 1
      %s67 = scalar_select %p64, %s65, %s66
      %p70 = pneg %p64
      %p71 = scmp.eq.s32.totalorder %s17, 1
      %p72 = por %p70, %p71
      %p73 = scmp.ne.s32.totalorder %s65, %s68
      %p74 = scmp.eq.s32.totalorder %s17, 0
      %p75 = por %p73, %p74
      %p76 = scmp.ne.s32.totalorder %s65, %s68
      %p77 = scmp.eq.s32.totalorder %s22, 1
      %p78 = por %p76, %p77
      %p79 = scmp.ne.s32.totalorder %s68, %s69
      %p80 = scmp.eq.s32.totalorder %s22, 0
      %p81 = por %p79, %p80
      %p82 = scmp.ne.s32.totalorder %s68, %s69
      %p83 = scmp.eq.s32.totalorder %s23, 1
      %p84 = por %p82, %p83
      %p86 = scmp.ne.s32.totalorder %s69, %s85
      %p87 = scmp.eq.s32.totalorder %s23, 0
      %p88 = por %p86, %p87
      %s89 = ssub.s32 %s25, %s32
      %p90 = scmp.eq.s32.totalorder %s89, 0
      %s92 = sadd.s32 %s91, 1
      %s93 = scalar_select %p90, %s91, %s92
      %p96 = pneg %p90
      %p97 = scmp.eq.s32.totalorder %s17, 1
      %p98 = por %p96, %p97
      %p99 = scmp.ne.s32.totalorder %s91, %s94
      %p100 = scmp.eq.s32.totalorder %s17, 0
      %p101 = por %p99, %p100
      %p102 = scmp.ne.s32.totalorder %s91, %s94
      %p103 = scmp.eq.s32.totalorder %s22, 1
      %p104 = por %p102, %p103
      %p105 = scmp.ne.s32.totalorder %s94, %s95
      %p106 = scmp.eq.s32.totalorder %s22, 0
      %p107 = por %p105, %p106
      %p108 = scmp.ne.s32.totalorder %s94, %s95
      %p109 = scmp.eq.s32.totalorder %s23, 1
      %p110 = por %p108, %p109
      %p112 = scmp.ne.s32.totalorder %s95, %s111
      %p113 = scmp.eq.s32.totalorder %s23, 0
      %p114 = por %p112, %p113
      %s115 = ssub.s32 %s25, %s32
      %p116 = scmp.eq.s32.totalorder %s115, 0
      %s118 = sadd.s32 %s117, 1
      %s119 = scalar_select %p116, %s117, %s118
      %p122 = pneg %p116
      %p123 = scmp.eq.s32.totalorder %s17, 1
      %p124 = por %p122, %p123
      %p125 = scmp.ne.s32.totalorder %s117, %s120
      %p126 = scmp.eq.s32.totalorder %s17, 0
      %p127 = por %p125, %p126
      %p128 = scmp.ne.s32.totalorder %s117, %s120
      %p129 = scmp.eq.s32.totalorder %s22, 1
      %p130 = por %p128, %p129
      %p131 = scmp.ne.s32.totalorder %s120, %s121
      %p132 = scmp.eq.s32.totalorder %s22, 0
      %p133 = por %p131, %p132
      %p134 = scmp.ne.s32.totalorder %s120, %s121
      %p135 = scmp.eq.s32.totalorder %s23, 1
      %p136 = por %p134, %p135
      %p138 = scmp.ne.s32.totalorder %s121, %s137
      %p139 = scmp.eq.s32.totalorder %s23, 0
      %p140 = por %p138, %p139
      %s141 = ssub.s32 %s24, %s36
      %s142 = ssub.s32 %s25, %s32
      %s143 = sor.u32 %s141, %s142
      %p144 = scmp.eq.s32.totalorder %s143, 0
      %s146 = sadd.s32 %s145, 1
      %s147 = scalar_select %p144, %s145, %s146
      %p150 = pneg %p144
      %p151 = scmp.eq.s32.totalorder %s17, 1
      %p152 = por %p150, %p151
      %p153 = scmp.ne.s32.totalorder %s145, %s148
      %p154 = scmp.eq.s32.totalorder %s17, 0
      %p155 = por %p153, %p154
      %p156 = scmp.ne.s32.totalorder %s145, %s148
      %p157 = scmp.eq.s32.totalorder %s22, 1
      %p158 = por %p156, %p157
      %p159 = scmp.ne.s32.totalorder %s148, %s149
      %p160 = scmp.eq.s32.totalorder %s22, 0
      %p161 = por %p159, %p160
      %p162 = scmp.ne.s32.totalorder %s148, %s149
      %p163 = scmp.eq.s32.totalorder %s23, 1
      %p164 = por %p162, %p163
      %p166 = scmp.ne.s32.totalorder %s149, %s165
      %p167 = scmp.eq.s32.totalorder %s23, 0
      %p168 = por %p166, %p167
      %p169 = scmp.le.s32.totalorder 1, %s17
      %p170 = scmp.lt.s32.totalorder %s17, 3
      %p171 = pnand %p169, %p170
      %p172 = pneg %p171
      // Predicated region
      $region9: #{tpu_custom_call.1} parent=5 // pred_check
        _
      $region10: #{tpu_custom_call.1} parent=5 // pred_check_branch
        %174 = sbr.rel (%p171) target = $region12
      $region11: #{tpu_custom_call.1} parent=5 // pred_region
        %s175 = ssub.s32 %s17, 1
        // Predicated region
        $region13: #{tpu_custom_call.1} parent=11 // pred_check
          %p176 = pneg %p81
        $region14: #{tpu_custom_call.1} parent=11 // pred_check_branch
          %178 = sbr.rel (%p176) target = $region16
        $region15: #{tpu_custom_call.1} parent=11 // pred_region
          %s180 = ssub.s32 1024, 1024
          %181 = vsyncadd [#allocation6], %s180
          %s182 = smul.addr %s27, 64
          %s183 = scalar_lea.hbm %s1, %s182
          %s184 = sshll.u32 [#allocation5], 4
          %s185 = int_to_ptr.vmem [resolvable:$true] %s184
          %190 = dma.hbm_to_vmem [thread:$0]  %s183, 1024, %s185, [#allocation6], 64, 64, 4
        $region16: #{tpu_custom_call.1} parent=11 // pred_fallthru
          _
        // Predicated region
        $region17: #{tpu_custom_call.1} parent=11 // pred_check
          %p191 = pneg %p107
        $region18: #{tpu_custom_call.1} parent=11 // pred_check_branch
          %193 = sbr.rel (%p191) target = $region20
        $region19: #{tpu_custom_call.1} parent=11 // pred_region
          %p194 = scmp.lt.s32.totalorder %s27, 0
          %s195 = scalar_select %p194, %s27, 0
          %s196 = scalar_lea.vmem %s2, %s195
        $region20: #{tpu_custom_call.1} parent=11 // pred_fallthru
          _
        // Predicated region
        $region21: #{tpu_custom_call.1} parent=11 // pred_check
          %p197 = pneg %p133
        $region22: #{tpu_custom_call.1} parent=11 // pred_check_branch
          %199 = sbr.rel (%p197) target = $region24
        $region23: #{tpu_custom_call.1} parent=11 // pred_region
          %p200 = scmp.lt.s32.totalorder %s27, 0
          %s201 = scalar_select %p200, %s27, 0
          %s202 = scalar_lea.vmem %s3, %s201
        $region24: #{tpu_custom_call.1} parent=11 // pred_fallthru
          _
      $region12: #{tpu_custom_call.1} parent=5 // pred_fallthru
        _
      %p203 = scmp.lt.s32.totalorder %s17, 2
      // Predicated region
      $region25: #{tpu_custom_call.1} parent=5 // pred_check
        %p204 = pneg %p203
      $region26: #{tpu_custom_call.1} parent=5 // pred_check_branch
        %206 = sbr.rel (%p204) target = $region28
      $region27: #{tpu_custom_call.1} parent=5 // pred_region
        // Predicated region
        $region29: #{tpu_custom_call.1} parent=27 // pred_check
          %p207 = pneg %p49
        $region30: #{tpu_custom_call.1} parent=27 // pred_check_branch
          %209 = sbr.rel (%p207) target = $region32
        $region31: #{tpu_custom_call.1} parent=27 // pred_region
          %s210 = sand.u32 %s39, 1
          %s211 = scalar_lea.sflag [#allocation3], %s210
          %s212 = sand.u32 %s39, 1
          %s213 = smul.addr %s212, 128
          %s214 = scalar_lea.vmem [#allocation2], %s213
          %s215 = smul.u32 32, %s24
          %s217 = ssub.s32 2048, 2048
          %218 = vsyncadd %s211, %s217
          %s219 = smul.addr %s215, 64
          %s220 = scalar_lea.hbm %s0, %s219
          %s221 = sshll.u32 %s214, 4
          %s222 = int_to_ptr.vmem [resolvable:$true] %s221
          %227 = dma.hbm_to_vmem [thread:$0]  %s220, 2048, %s222, %s211, 64, 64, 4
        $region32: #{tpu_custom_call.1} parent=27 // pred_fallthru
          _
      $region28: #{tpu_custom_call.1} parent=5 // pred_fallthru
        _
      %p228 = scmp.le.s32.totalorder 1, %s17
      %p229 = scmp.lt.s32.totalorder %s17, 3
      %p230 = pnand %p228, %p229
      %p231 = pneg %p230
      // Predicated region
      $region33: #{tpu_custom_call.1} parent=5 // pred_check
        _
      $region34: #{tpu_custom_call.1} parent=5 // pred_check_branch
        %233 = sbr.rel (%p230) target = $region36
      $region35: #{tpu_custom_call.1} parent=5 // pred_region
        %s234 = ssub.s32 %s17, 1
        %s235 = sand.u32 %s42, 1
        %s236 = scalar_lea.sflag [#allocation3], %s235
        %s237 = sand.u32 %s42, 1
        %s238 = smul.addr %s237, 128
        %s239 = scalar_lea.vmem [#allocation2], %s238
        // Predicated region
        $region37: #{tpu_custom_call.1} parent=35 // pred_check
          %p240 = pneg %p55
        $region38: #{tpu_custom_call.1} parent=35 // pred_check_branch
          %242 = sbr.rel (%p240) target = $region40
        $region39: #{tpu_custom_call.1} parent=35 // pred_region
          %243 = dma.done %s236, 2048
        $region40: #{tpu_custom_call.1} parent=35 // pred_fallthru
          _
        // Predicated region
        $region41: #{tpu_custom_call.1} parent=35 // pred_check
          %p244 = pneg %p81
        $region42: #{tpu_custom_call.1} parent=35 // pred_check_branch
          %246 = sbr.rel (%p244) target = $region44
        $region43: #{tpu_custom_call.1} parent=35 // pred_region
          %247 = dma.done [#allocation6], 1024
        $region44: #{tpu_custom_call.1} parent=35 // pred_fallthru
          _
        %s248 = sand.u32 %s42, 1
        %s249 = scalar_lea.sflag [#allocation3], %s248
        %s250 = sand.u32 %s42, 1
        %s251 = smul.addr %s250, 128
        %s252 = scalar_lea.vmem [#allocation2], %s251
        %p253 = pneg %p55
        %p254 = pneg %p52
        %p255 = pneg %p81
        %p256 = pneg %p78
        %p257 = scmp.lt.s32.totalorder %s27, 0
        %s258 = scalar_select %p257, %s27, 0
        %s259 = scalar_lea.vmem %s2, %s258
        %p260 = pneg %p107
        %p261 = pneg %p104
        %p262 = scmp.lt.s32.totalorder %s27, 0
        %s263 = scalar_select %p262, %s27, 0
        %s264 = scalar_lea.vmem %s3, %s263
        %p265 = pneg %p133
        %p266 = pneg %p130
        %p267 = pneg %p161
        %p268 = pneg %p158
        %s269 = sand.u32 %s148, 1
        %s270 = scalar_lea.sflag [#allocation4], %s269
        %s271 = sand.u32 %s148, 1
        %s272 = smul.addr %s271, 128
        %s273 = scalar_lea.vmem [#allocation7], %s272
        %s274 = smul.u32 32, %s26
        %p275 = scmp.lt.s32.totalorder %s27, 0
        %s276 = scalar_select %p275, %s27, 0
        %s277 = scalar_lea.vmem %s2, %s276
        %p278 = scmp.lt.s32.totalorder %s27, 0
        %s279 = scalar_select %p278, %s27, 0
        %s280 = scalar_lea.vmem %s3, %s279
        %s281 = smul.u32 32, %s26
        %v283 = vld [vmem:[%s239] sm:$0xf]
        %v284 = vld [vmem:[%s239 + $0x4] sm:$0xf]
        %v285 = vld [vmem:[%s239 + $0x8] sm:$0xf]
        %v286 = vld [vmem:[%s239 + $0xc] sm:$0xf]
        %v287 = vld [vmem:[%s239 + $0x10] sm:$0xf]
        %v288 = vld [vmem:[%s239 + $0x14] sm:$0xf]
        %v289 = vld [vmem:[%s239 + $0x18] sm:$0xf]
        %v290 = vld [vmem:[%s239 + $0x1c] sm:$0xf]
        %v291 = vld [vmem:[%s239 + $0x20] sm:$0xf]
        %v292 = vld [vmem:[%s239 + $0x24] sm:$0xf]
        %v293 = vld [vmem:[%s239 + $0x28] sm:$0xf]
        %v294 = vld [vmem:[%s239 + $0x2c] sm:$0xf]
        %v295 = vld [vmem:[%s239 + $0x30] sm:$0xf]
        %v296 = vld [vmem:[%s239 + $0x34] sm:$0xf]
        %v297 = vld [vmem:[%s239 + $0x38] sm:$0xf]
        %v298 = vld [vmem:[%s239 + $0x3c] sm:$0xf]
        %v299 = vld [vmem:[%s239 + $0x40] sm:$0xf]
        %v300 = vld [vmem:[%s239 + $0x44] sm:$0xf]
        %v301 = vld [vmem:[%s239 + $0x48] sm:$0xf]
        %v302 = vld [vmem:[%s239 + $0x4c] sm:$0xf]
        %v303 = vld [vmem:[%s239 + $0x50] sm:$0xf]
        %v304 = vld [vmem:[%s239 + $0x54] sm:$0xf]
        %v305 = vld [vmem:[%s239 + $0x58] sm:$0xf]
        %v306 = vld [vmem:[%s239 + $0x5c] sm:$0xf]
        %v307 = vld [vmem:[%s239 + $0x60] sm:$0xf]
        %v308 = vld [vmem:[%s239 + $0x64] sm:$0xf]
        %v309 = vld [vmem:[%s239 + $0x68] sm:$0xf]
        %v310 = vld [vmem:[%s239 + $0x6c] sm:$0xf]
        %v311 = vld [vmem:[%s239 + $0x70] sm:$0xf]
        %v312 = vld [vmem:[%s239 + $0x74] sm:$0xf]
        %v313 = vld [vmem:[%s239 + $0x78] sm:$0xf]
        %v314 = vld [vmem:[%s239 + $0x7c] sm:$0xf]
        %v315 = vld [vmem:[#allocation5] sm:$0xf]
        %v316 = vld [vmem:[#allocation5 + $0x4] sm:$0xf]
        %v317 = vld [vmem:[#allocation5 + $0x8] sm:$0xf]
        %v318 = vld [vmem:[#allocation5 + $0xc] sm:$0xf]
        %v319 = vld [vmem:[#allocation5 + $0x10] sm:$0xf]
        %v320 = vld [vmem:[#allocation5 + $0x14] sm:$0xf]
        %v321 = vld [vmem:[#allocation5 + $0x18] sm:$0xf]
        %v322 = vld [vmem:[#allocation5 + $0x1c] sm:$0xf]
        %v323 = vld [vmem:[#allocation5 + $0x20] sm:$0xf]
        %v324 = vld [vmem:[#allocation5 + $0x24] sm:$0xf]
        %v325 = vld [vmem:[#allocation5 + $0x28] sm:$0xf]
        %v326 = vld [vmem:[#allocation5 + $0x2c] sm:$0xf]
        %v327 = vld [vmem:[#allocation5 + $0x30] sm:$0xf]
        %v328 = vld [vmem:[#allocation5 + $0x34] sm:$0xf]
        %v329 = vld [vmem:[#allocation5 + $0x38] sm:$0xf]
        %v330 = vld [vmem:[#allocation5 + $0x3c] sm:$0xf]
        %v363 = vunpack.c.l.b16 %v283
        %v364 = vunpack.c.l.b16 %v284
        %v365 = vunpack.c.l.b16 %v285
        %v366 = vunpack.c.l.b16 %v286
        %v367 = vunpack.c.l.b16 %v287
        %v368 = vunpack.c.l.b16 %v288
        %v369 = vunpack.c.l.b16 %v289
        %v370 = vunpack.c.l.b16 %v290
        %v371 = vunpack.c.l.b16 %v291
        %v372 = vunpack.c.l.b16 %v292
        %v373 = vunpack.c.l.b16 %v293
        %v374 = vunpack.c.l.b16 %v294
        %v375 = vunpack.c.l.b16 %v295
        %v376 = vunpack.c.l.b16 %v296
        %v377 = vunpack.c.l.b16 %v297
        %v378 = vunpack.c.l.b16 %v298
        %v379 = vunpack.c.l.b16 %v299
        %v380 = vunpack.c.l.b16 %v300
        %v381 = vunpack.c.l.b16 %v301
        %v382 = vunpack.c.l.b16 %v302
        %v383 = vunpack.c.l.b16 %v303
        %v384 = vunpack.c.l.b16 %v304
        %v385 = vunpack.c.l.b16 %v305
        %v386 = vunpack.c.l.b16 %v306
        %v387 = vunpack.c.l.b16 %v307
        %v388 = vunpack.c.l.b16 %v308
        %v389 = vunpack.c.l.b16 %v309
        %v390 = vunpack.c.l.b16 %v310
        %v391 = vunpack.c.l.b16 %v311
        %v392 = vunpack.c.l.b16 %v312
        %v393 = vunpack.c.l.b16 %v313
        %v394 = vunpack.c.l.b16 %v314
        %v395 = vpack.c.b16 %v364, %v363
        %v396 = vpack.c.b16 %v366, %v365
        %v397 = vpack.c.b16 %v368, %v367
        %v398 = vpack.c.b16 %v370, %v369
        %v399 = vpack.c.b16 %v372, %v371
        %v400 = vpack.c.b16 %v374, %v373
        %v401 = vpack.c.b16 %v376, %v375
        %v402 = vpack.c.b16 %v378, %v377
        %v403 = vpack.c.b16 %v380, %v379
        %v404 = vpack.c.b16 %v382, %v381
        %v405 = vpack.c.b16 %v384, %v383
        %v406 = vpack.c.b16 %v386, %v385
        %v407 = vpack.c.b16 %v388, %v387
        %v408 = vpack.c.b16 %v390, %v389
        %v409 = vpack.c.b16 %v392, %v391
        %v410 = vpack.c.b16 %v394, %v393
        %v443 = vunpack.c.l.b16 %v315
        %v444 = vunpack.c.l.b16 %v316
        %v445 = vunpack.c.l.b16 %v317
        %v446 = vunpack.c.l.b16 %v318
        %v447 = vunpack.c.l.b16 %v319
        %v448 = vunpack.c.l.b16 %v320
        %v449 = vunpack.c.l.b16 %v321
        %v450 = vunpack.c.l.b16 %v322
        %v451 = vunpack.c.l.b16 %v323
        %v452 = vunpack.c.l.b16 %v324
        %v453 = vunpack.c.l.b16 %v325
        %v454 = vunpack.c.l.b16 %v326
        %v455 = vunpack.c.l.b16 %v327
        %v456 = vunpack.c.l.b16 %v328
        %v457 = vunpack.c.l.b16 %v329
        %v458 = vunpack.c.l.b16 %v330
        %v459 = vpack.c.b16 %v444, %v443
        %v460 = vpack.c.b16 %v446, %v445
        %v461 = vpack.c.b16 %v448, %v447
        %v462 = vpack.c.b16 %v450, %v449
        %v463 = vpack.c.b16 %v452, %v451
        %v464 = vpack.c.b16 %v454, %v453
        %v465 = vpack.c.b16 %v456, %v455
        %v466 = vpack.c.b16 %v458, %v457
        %475 = vmatprep.subr.bf16.mxu0 0
        %476 = vmatpush1.bf16.msra.mxu0 %v459
        %477 = vmatprep.subr.bf16.mxu0 0
        %478 = vmatpush1.bf16.msra.mxu0 %v460
        %479 = vmatprep.subr.bf16.mxu0 0
        %480 = vmatpush1.bf16.msra.mxu0 %v461
        %481 = vmatprep.subr.bf16.mxu0 0
        %482 = vmatpush1.bf16.msra.mxu0 %v462
        %483 = vmatprep.subr.bf16.mxu0 0
        %484 = vmatpush1.bf16.msra.mxu0 %v463
        %485 = vmatprep.subr.bf16.mxu0 0
        %486 = vmatpush1.bf16.msra.mxu0 %v464
        %487 = vmatprep.subr.bf16.mxu0 0
        %488 = vmatpush1.bf16.msra.mxu0 %v465
        %489 = vmatprep.subr.bf16.mxu0 0
        %490 = vmatpush1.bf16.msra.mxu0 %v466
        %491 = vmatprep.subr.bf16.mxu0 0
        %492 = vmatpush1.bf16.msra.mxu0 0
        %493 = vmatprep.subr.bf16.mxu0 0
        %494 = vmatpush1.bf16.msra.mxu0 0
        %495 = vmatprep.subr.bf16.mxu0 0
        %496 = vmatpush1.bf16.msra.mxu0 0
        %497 = vmatprep.subr.bf16.mxu0 0
        %498 = vmatpush1.bf16.msra.mxu0 0
        %499 = vmatprep.subr.bf16.mxu0 0
        %500 = vmatpush1.bf16.msra.mxu0 0
        %501 = vmatprep.subr.bf16.mxu0 0
        %502 = vmatpush1.bf16.msra.mxu0 0
        %503 = vmatprep.subr.bf16.mxu0 0
        %504 = vmatpush1.bf16.msra.mxu0 0
        %505 = vmatprep.subr.bf16.mxu0 0
        %506 = vmatpush1.bf16.msra.mxu0 0
        %507 = vmatprep.mubr.bf16.mxu0 0
        %508 = vmatmul.mubr.bf16.gmra.mrb[0].mxu0 %v395
        %v509 = vpop.f32.mrb[0].mxu0
        %v510 = vadd.f32 0.0, %v509
        %v511 = vpop.f32.mrb[0].mxu0
        %v512 = vpop.f32.mrb[0].mxu0
        %v513 = vadd.f32 0.0, %v512
        %v514 = vpop.f32.mrb[0].mxu0
        %515 = vmatprep.mubr.bf16.mxu0 0
        %516 = vmatmul.mubr.bf16.gmra.mrb[0].mxu0 %v396
        %v517 = vpop.f32.mrb[0].mxu0
        %v518 = vadd.f32 0.0, %v517
        %v519 = vpop.f32.mrb[0].mxu0
        %v520 = vpop.f32.mrb[0].mxu0
        %v521 = vadd.f32 0.0, %v520
        %v522 = vpop.f32.mrb[0].mxu0
        %523 = vmatprep.mubr.bf16.mxu0 0
        %524 = vmatmul.mubr.bf16.gmra.mrb[0].mxu0 %v397
        %v525 = vpop.f32.mrb[0].mxu0
        %v526 = vadd.f32 0.0, %v525
        %v527 = vpop.f32.mrb[0].mxu0
        %v528 = vpop.f32.mrb[0].mxu0
        %v529 = vadd.f32 0.0, %v528
        %v530 = vpop.f32.mrb[0].mxu0
        %531 = vmatprep.mubr.bf16.mxu0 0
        %532 = vmatmul.mubr.bf16.gmra.mrb[0].mxu0 %v398
        %v533 = vpop.f32.mrb[0].mxu0
        %v534 = vadd.f32 0.0, %v533
        %v535 = vpop.f32.mrb[0].mxu0
        %v536 = vpop.f32.mrb[0].mxu0
        %v537 = vadd.f32 0.0, %v536
        %v538 = vpop.f32.mrb[0].mxu0
        %539 = vmatprep.mubr.bf16.mxu0 0
        %540 = vmatmul.mubr.bf16.gmra.mrb[0].mxu0 %v399
        %v541 = vpop.f32.mrb[0].mxu0
        %v542 = vadd.f32 0.0, %v541
        %v543 = vpop.f32.mrb[0].mxu0
        %v544 = vpop.f32.mrb[0].mxu0
        %v545 = vadd.f32 0.0, %v544
        %v546 = vpop.f32.mrb[0].mxu0
        %547 = vmatprep.mubr.bf16.mxu0 0
        %548 = vmatmul.mubr.bf16.gmra.mrb[0].mxu0 %v400
        %v549 = vpop.f32.mrb[0].mxu0
        %v550 = vadd.f32 0.0, %v549
        %v551 = vpop.f32.mrb[0].mxu0
        %v552 = vpop.f32.mrb[0].mxu0
        %v553 = vadd.f32 0.0, %v552
        %v554 = vpop.f32.mrb[0].mxu0
        %555 = vmatprep.mubr.bf16.mxu0 0
        %556 = vmatmul.mubr.bf16.gmra.mrb[0].mxu0 %v401
        %v557 = vpop.f32.mrb[0].mxu0
        %v558 = vadd.f32 0.0, %v557
        %v559 = vpop.f32.mrb[0].mxu0
        %v560 = vpop.f32.mrb[0].mxu0
        %v561 = vadd.f32 0.0, %v560
        %v562 = vpop.f32.mrb[0].mxu0
        %563 = vmatprep.mubr.bf16.mxu0 0
        %564 = vmatmul.mubr.bf16.gmra.mrb[0].mxu0 %v402
        %v565 = vpop.f32.mrb[0].mxu0
        %v566 = vadd.f32 0.0, %v565
        %v567 = vpop.f32.mrb[0].mxu0
        %v568 = vpop.f32.mrb[0].mxu0
        %v569 = vadd.f32 0.0, %v568
        %v570 = vpop.f32.mrb[0].mxu0
        %571 = vmatprep.mubr.bf16.mxu0 0
        %572 = vmatmul.mubr.bf16.gmra.mrb[0].mxu0 %v403
        %v573 = vpop.f32.mrb[0].mxu0
        %v574 = vadd.f32 0.0, %v573
        %v575 = vpop.f32.mrb[0].mxu0
        %v576 = vpop.f32.mrb[0].mxu0
        %v577 = vadd.f32 0.0, %v576
        %v578 = vpop.f32.mrb[0].mxu0
        %579 = vmatprep.mubr.bf16.mxu0 0
        %580 = vmatmul.mubr.bf16.gmra.mrb[0].mxu0 %v404
        %v581 = vpop.f32.mrb[0].mxu0
        %v582 = vadd.f32 0.0, %v581
        %v583 = vpop.f32.mrb[0].mxu0
        %v584 = vpop.f32.mrb[0].mxu0
        %v585 = vadd.f32 0.0, %v584
        %v586 = vpop.f32.mrb[0].mxu0
        %587 = vmatprep.mubr.bf16.mxu0 0
        %588 = vmatmul.mubr.bf16.gmra.mrb[0].mxu0 %v405
        %v589 = vpop.f32.mrb[0].mxu0
        %v590 = vadd.f32 0.0, %v589
        %v591 = vpop.f32.mrb[0].mxu0
        %v592 = vpop.f32.mrb[0].mxu0
        %v593 = vadd.f32 0.0, %v592
        %v594 = vpop.f32.mrb[0].mxu0
        %595 = vmatprep.mubr.bf16.mxu0 0
        %596 = vmatmul.mubr.bf16.gmra.mrb[0].mxu0 %v406
        %v597 = vpop.f32.mrb[0].mxu0
        %v598 = vadd.f32 0.0, %v597
        %v599 = vpop.f32.mrb[0].mxu0
        %v600 = vpop.f32.mrb[0].mxu0
        %v601 = vadd.f32 0.0, %v600
        %v602 = vpop.f32.mrb[0].mxu0
        %603 = vmatprep.mubr.bf16.mxu0 0
        %604 = vmatmul.mubr.bf16.gmra.mrb[0].mxu0 %v407
        %v605 = vpop.f32.mrb[0].mxu0
        %v606 = vadd.f32 0.0, %v605
        %v607 = vpop.f32.mrb[0].mxu0
        %v608 = vpop.f32.mrb[0].mxu0
        %v609 = vadd.f32 0.0, %v608
        %v610 = vpop.f32.mrb[0].mxu0
        %611 = vmatprep.mubr.bf16.mxu0 0
        %612 = vmatmul.mubr.bf16.gmra.mrb[0].mxu0 %v408
        %v613 = vpop.f32.mrb[0].mxu0
        %v614 = vadd.f32 0.0, %v613
        %v615 = vpop.f32.mrb[0].mxu0
        %v616 = vpop.f32.mrb[0].mxu0
        %v617 = vadd.f32 0.0, %v616
        %v618 = vpop.f32.mrb[0].mxu0
        %619 = vmatprep.mubr.bf16.mxu0 0
        %620 = vmatmul.mubr.bf16.gmra.mrb[0].mxu0 %v409
        %v621 = vpop.f32.mrb[0].mxu0
        %v622 = vadd.f32 0.0, %v621
        %v623 = vpop.f32.mrb[0].mxu0
        %v624 = vpop.f32.mrb[0].mxu0
        %v625 = vadd.f32 0.0, %v624
        %v626 = vpop.f32.mrb[0].mxu0
        %627 = vmatprep.mubr.bf16.mxu0 0
        %628 = vmatmul.mubr.bf16.gmra.mrb[0].mxu0 %v410
        %v629 = vpop.f32.mrb[0].mxu0
        %v630 = vadd.f32 0.0, %v629
        %v631 = vpop.f32.mrb[0].mxu0
        %v632 = vpop.f32.mrb[0].mxu0
        %v633 = vadd.f32 0.0, %v632
        %v634 = vpop.f32.mrb[0].mxu0
        %635 = vdwg.mxu0
        %v636 = vld [vmem:[%s277] sm:$0x1]
        %v638 = vlaneseq
        %v639 = vshrl.u32 %v638, 7
        %v640 = vsub.s32 0, %v639
        %v641 = vrot.slane %v636, %v640
        %v643 = vmul.f32 %v510, %v641
        %v644 = vmul.f32 %v513, %v641
        %v645 = vmul.f32 %v518, %v641
        %v646 = vmul.f32 %v521, %v641
        %v647 = vmul.f32 %v526, %v641
        %v648 = vmul.f32 %v529, %v641
        %v649 = vmul.f32 %v534, %v641
        %v650 = vmul.f32 %v537, %v641
        %v651 = vmul.f32 %v542, %v641
        %v652 = vmul.f32 %v545, %v641
        %v653 = vmul.f32 %v550, %v641
        %v654 = vmul.f32 %v553, %v641
        %v655 = vmul.f32 %v558, %v641
        %v656 = vmul.f32 %v561, %v641
        %v657 = vmul.f32 %v566, %v641
        %v658 = vmul.f32 %v569, %v641
        %v659 = vmul.f32 %v574, %v641
        %v660 = vmul.f32 %v577, %v641
        %v661 = vmul.f32 %v582, %v641
        %v662 = vmul.f32 %v585, %v641
        %v663 = vmul.f32 %v590, %v641
        %v664 = vmul.f32 %v593, %v641
        %v665 = vmul.f32 %v598, %v641
        %v666 = vmul.f32 %v601, %v641
        %v667 = vmul.f32 %v606, %v641
        %v668 = vmul.f32 %v609, %v641
        %v669 = vmul.f32 %v614, %v641
        %v670 = vmul.f32 %v617, %v641
        %v671 = vmul.f32 %v622, %v641
        %v672 = vmul.f32 %v625, %v641
        %v673 = vmul.f32 %v630, %v641
        %v674 = vmul.f32 %v633, %v641
        %v675 = vld [vmem:[%s280] sm:$0x1]
        %v677 = vlaneseq
        %v678 = vshrl.u32 %v677, 7
        %v679 = vsub.s32 0, %v678
        %v680 = vrot.slane %v675, %v679
        %v682 = vadd.f32 %v643, %v680
        %v683 = vadd.f32 %v644, %v680
        %v684 = vadd.f32 %v645, %v680
        %v685 = vadd.f32 %v646, %v680
        %v686 = vadd.f32 %v647, %v680
        %v687 = vadd.f32 %v648, %v680
        %v688 = vadd.f32 %v649, %v680
        %v689 = vadd.f32 %v650, %v680
        %v690 = vadd.f32 %v651, %v680
        %v691 = vadd.f32 %v652, %v680
        %v692 = vadd.f32 %v653, %v680
        %v693 = vadd.f32 %v654, %v680
        %v694 = vadd.f32 %v655, %v680
        %v695 = vadd.f32 %v656, %v680
        %v696 = vadd.f32 %v657, %v680
        %v697 = vadd.f32 %v658, %v680
        %v698 = vadd.f32 %v659, %v680
        %v699 = vadd.f32 %v660, %v680
        %v700 = vadd.f32 %v661, %v680
        %v701 = vadd.f32 %v662, %v680
        %v702 = vadd.f32 %v663, %v680
        %v703 = vadd.f32 %v664, %v680
        %v704 = vadd.f32 %v665, %v680
        %v705 = vadd.f32 %v666, %v680
        %v706 = vadd.f32 %v667, %v680
        %v707 = vadd.f32 %v668, %v680
        %v708 = vadd.f32 %v669, %v680
        %v709 = vadd.f32 %v670, %v680
        %v710 = vadd.f32 %v671, %v680
        %v711 = vadd.f32 %v672, %v680
        %v712 = vadd.f32 %v673, %v680
        %v713 = vadd.f32 %v674, %v680
        %v714 = vmax.f32 %v682, 0.0
        %v715 = vmax.f32 %v683, 0.0
        %v716 = vmax.f32 %v684, 0.0
        %v717 = vmax.f32 %v685, 0.0
        %v718 = vmax.f32 %v686, 0.0
        %v719 = vmax.f32 %v687, 0.0
        %v720 = vmax.f32 %v688, 0.0
        %v721 = vmax.f32 %v689, 0.0
        %v722 = vmax.f32 %v690, 0.0
        %v723 = vmax.f32 %v691, 0.0
        %v724 = vmax.f32 %v692, 0.0
        %v725 = vmax.f32 %v693, 0.0
        %v726 = vmax.f32 %v694, 0.0
        %v727 = vmax.f32 %v695, 0.0
        %v728 = vmax.f32 %v696, 0.0
        %v729 = vmax.f32 %v697, 0.0
        %v730 = vmax.f32 %v698, 0.0
        %v731 = vmax.f32 %v699, 0.0
        %v732 = vmax.f32 %v700, 0.0
        %v733 = vmax.f32 %v701, 0.0
        %v734 = vmax.f32 %v702, 0.0
        %v735 = vmax.f32 %v703, 0.0
        %v736 = vmax.f32 %v704, 0.0
        %v737 = vmax.f32 %v705, 0.0
        %v738 = vmax.f32 %v706, 0.0
        %v739 = vmax.f32 %v707, 0.0
        %v740 = vmax.f32 %v708, 0.0
        %v741 = vmax.f32 %v709, 0.0
        %v742 = vmax.f32 %v710, 0.0
        %v743 = vmax.f32 %v711, 0.0
        %v744 = vmax.f32 %v712, 0.0
        %v745 = vmax.f32 %v713, 0.0
        %v746 = vpack.c.bf16 %v715, %v714
        %v747 = vpack.c.bf16 %v717, %v716
        %v748 = vpack.c.bf16 %v719, %v718
        %v749 = vpack.c.bf16 %v721, %v720
        %v750 = vpack.c.bf16 %v723, %v722
        %v751 = vpack.c.bf16 %v725, %v724
        %v752 = vpack.c.bf16 %v727, %v726
        %v753 = vpack.c.bf16 %v729, %v728
        %v754 = vpack.c.bf16 %v731, %v730
        %v755 = vpack.c.bf16 %v733, %v732
        %v756 = vpack.c.bf16 %v735, %v734
        %v757 = vpack.c.bf16 %v737, %v736
        %v758 = vpack.c.bf16 %v739, %v738
        %v759 = vpack.c.bf16 %v741, %v740
        %v760 = vpack.c.bf16 %v743, %v742
        %v761 = vpack.c.bf16 %v745, %v744
        %v778 = vunpack.c.l.b16 %v746
        %v779 = vunpack.c.h.b16 %v746
        %v780 = vunpack.c.l.b16 %v747
        %v781 = vunpack.c.h.b16 %v747
        %v782 = vunpack.c.l.b16 %v748
        %v783 = vunpack.c.h.b16 %v748
        %v784 = vunpack.c.l.b16 %v749
        %v785 = vunpack.c.h.b16 %v749
        %v786 = vunpack.c.l.b16 %v750
        %v787 = vunpack.c.h.b16 %v750
        %v788 = vunpack.c.l.b16 %v751
        %v789 = vunpack.c.h.b16 %v751
        %v790 = vunpack.c.l.b16 %v752
        %v791 = vunpack.c.h.b16 %v752
        %v792 = vunpack.c.l.b16 %v753
        %v793 = vunpack.c.h.b16 %v753
        %v794 = vunpack.c.l.b16 %v754
        %v795 = vunpack.c.h.b16 %v754
        %v796 = vunpack.c.l.b16 %v755
        %v797 = vunpack.c.h.b16 %v755
        %v798 = vunpack.c.l.b16 %v756
        %v799 = vunpack.c.h.b16 %v756
        %v800 = vunpack.c.l.b16 %v757
        %v801 = vunpack.c.h.b16 %v757
        %v802 = vunpack.c.l.b16 %v758
        %v803 = vunpack.c.h.b16 %v758
        %v804 = vunpack.c.l.b16 %v759
        %v805 = vunpack.c.h.b16 %v759
        %v806 = vunpack.c.l.b16 %v760
        %v807 = vunpack.c.h.b16 %v760
        %v808 = vunpack.c.l.b16 %v761
        %v809 = vunpack.c.h.b16 %v761
        %v810 = vpack.c.b16 %v778, %v778
        %v811 = vpack.c.b16 %v779, %v779
        %v812 = vpack.c.b16 %v780, %v780
        %v813 = vpack.c.b16 %v781, %v781
        %v814 = vpack.c.b16 %v782, %v782
        %v815 = vpack.c.b16 %v783, %v783
        %v816 = vpack.c.b16 %v784, %v784
        %v817 = vpack.c.b16 %v785, %v785
        %v818 = vpack.c.b16 %v786, %v786
        %v819 = vpack.c.b16 %v787, %v787
        %v820 = vpack.c.b16 %v788, %v788
        %v821 = vpack.c.b16 %v789, %v789
        %v822 = vpack.c.b16 %v790, %v790
        %v823 = vpack.c.b16 %v791, %v791
        %v824 = vpack.c.b16 %v792, %v792
        %v825 = vpack.c.b16 %v793, %v793
        %v826 = vpack.c.b16 %v794, %v794
        %v827 = vpack.c.b16 %v795, %v795
        %v828 = vpack.c.b16 %v796, %v796
        %v829 = vpack.c.b16 %v797, %v797
        %v830 = vpack.c.b16 %v798, %v798
        %v831 = vpack.c.b16 %v799, %v799
        %v832 = vpack.c.b16 %v800, %v800
        %v833 = vpack.c.b16 %v801, %v801
        %v834 = vpack.c.b16 %v802, %v802
        %v835 = vpack.c.b16 %v803, %v803
        %v836 = vpack.c.b16 %v804, %v804
        %v837 = vpack.c.b16 %v805, %v805
        %v838 = vpack.c.b16 %v806, %v806
        %v839 = vpack.c.b16 %v807, %v807
        %v840 = vpack.c.b16 %v808, %v808
        %v841 = vpack.c.b16 %v809, %v809
        %874 = vst [vmem:[%s273] sm:$0xf] %v810
        %875 = vst [vmem:[%s273 + $0x4] sm:$0xf] %v811
        %876 = vst [vmem:[%s273 + $0x8] sm:$0xf] %v812
        %877 = vst [vmem:[%s273 + $0xc] sm:$0xf] %v813
        %878 = vst [vmem:[%s273 + $0x10] sm:$0xf] %v814
        %879 = vst [vmem:[%s273 + $0x14] sm:$0xf] %v815
        %880 = vst [vmem:[%s273 + $0x18] sm:$0xf] %v816
        %881 = vst [vmem:[%s273 + $0x1c] sm:$0xf] %v817
        %882 = vst [vmem:[%s273 + $0x20] sm:$0xf] %v818
        %883 = vst [vmem:[%s273 + $0x24] sm:$0xf] %v819
        %884 = vst [vmem:[%s273 + $0x28] sm:$0xf] %v820
        %885 = vst [vmem:[%s273 + $0x2c] sm:$0xf] %v821
        %886 = vst [vmem:[%s273 + $0x30] sm:$0xf] %v822
        %887 = vst [vmem:[%s273 + $0x34] sm:$0xf] %v823
        %888 = vst [vmem:[%s273 + $0x38] sm:$0xf] %v824
        %889 = vst [vmem:[%s273 + $0x3c] sm:$0xf] %v825
        %890 = vst [vmem:[%s273 + $0x40] sm:$0xf] %v826
        %891 = vst [vmem:[%s273 + $0x44] sm:$0xf] %v827
        %892 = vst [vmem:[%s273 + $0x48] sm:$0xf] %v828
        %893 = vst [vmem:[%s273 + $0x4c] sm:$0xf] %v829
        %894 = vst [vmem:[%s273 + $0x50] sm:$0xf] %v830
        %895 = vst [vmem:[%s273 + $0x54] sm:$0xf] %v831
        %896 = vst [vmem:[%s273 + $0x58] sm:$0xf] %v832
        %897 = vst [vmem:[%s273 + $0x5c] sm:$0xf] %v833
        %898 = vst [vmem:[%s273 + $0x60] sm:$0xf] %v834
        %899 = vst [vmem:[%s273 + $0x64] sm:$0xf] %v835
        %900 = vst [vmem:[%s273 + $0x68] sm:$0xf] %v836
        %901 = vst [vmem:[%s273 + $0x6c] sm:$0xf] %v837
        %902 = vst [vmem:[%s273 + $0x70] sm:$0xf] %v838
        %903 = vst [vmem:[%s273 + $0x74] sm:$0xf] %v839
        %904 = vst [vmem:[%s273 + $0x78] sm:$0xf] %v840
        %905 = vst [vmem:[%s273 + $0x7c] sm:$0xf] %v841
        %s906 = sand.u32 %s148, 1
        %s907 = scalar_lea.sflag [#allocation4], %s906
        %s908 = sand.u32 %s148, 1
        %s909 = smul.addr %s908, 128
        %s910 = scalar_lea.vmem [#allocation7], %s909
        // Predicated region
        $region45: #{tpu_custom_call.1} parent=35 // pred_check
          %p911 = pneg %p158
        $region46: #{tpu_custom_call.1} parent=35 // pred_check_branch
          %913 = sbr.rel (%p911) target = $region48
        $region47: #{tpu_custom_call.1} parent=35 // pred_region
          %s914 = smul.u32 32, %s26
          %s916 = ssub.s32 2048, 2048
          %917 = vsyncadd %s907, %s916
          %s918 = sadd.s32 %s27, %s914
          %s919 = smul.addr %s918, 64
          %s920 = scalar_lea.hbm %s4, %s919
          %s921 = sshll.u32 %s910, 4
          %s922 = int_to_ptr.vmem [resolvable:$true] %s921
          %927 = dma.vmem_to_hbm [thread:$0]  %s922, 2048, %s920, %s907, 64, 64, 4
        $region48: #{tpu_custom_call.1} parent=35 // pred_fallthru
          _
      $region36: #{tpu_custom_call.1} parent=5 // pred_fallthru
        _
      %p928 = scmp.le.s32.totalorder 2, %s17
      // Predicated region
      $region49: #{tpu_custom_call.1} parent=5 // pred_check
        %p929 = pneg %p928
      $region50: #{tpu_custom_call.1} parent=5 // pred_check_branch
        %931 = sbr.rel (%p929) target = $region52
      $region51: #{tpu_custom_call.1} parent=5 // pred_region
        %s932 = ssub.s32 %s17, 2
        // Predicated region
        $region53: #{tpu_custom_call.1} parent=51 // pred_check
          %p933 = pneg %p164
        $region54: #{tpu_custom_call.1} parent=51 // pred_check_branch
          %935 = sbr.rel (%p933) target = $region56
        $region55: #{tpu_custom_call.1} parent=51 // pred_region
          %s936 = sand.u32 %s149, 1
          %s937 = scalar_lea.sflag [#allocation4], %s936
          %s938 = sand.u32 %s149, 1
          %s939 = smul.addr %s938, 128
          %s940 = scalar_lea.vmem [#allocation7], %s939
          %941 = dma.done %s937, 2048
        $region56: #{tpu_custom_call.1} parent=51 // pred_fallthru
          _
      $region52: #{tpu_custom_call.1} parent=5 // pred_fallthru
        _
    $region6: #{tpu_custom_call.1} parent=1 // loop_footer
      %s21 = sadd.s32 1, %s17
    $region7: #{tpu_custom_call.1} parent=1 // loop_footer_branch
      %16 = sbr.rel target = $region3
    $region8: #{tpu_custom_call.1} parent=1 // loop_exit
      _
    %942 = vsyncpa [#allocation3], 1
    %s943 = scalar_lea.sflag [#allocation3], 1
    %944 = vsyncpa %s943, 1
    %945 = vsyncpa [#allocation6], 1
    %946 = vsyncpa [#allocation4], 1
    %s947 = scalar_lea.sflag [#allocation4], 1
    %948 = vsyncpa %s947, 1

</llo_original>
